<compile_context>
chip_gen: v7x
topology: tpu7x:2x2x1
jax: 0.10.0
libtpu: 0.0.40
codegen_flags: <defaults>
</compile_context>

<pallas_src>
import functools

import jax
import jax.numpy as jnp
from jax.experimental import pallas as pl
from jax.experimental.pallas import tpu as pltpu


# ----------------------------------------------------------------------------
# Fused all-layers kernel
# ----------------------------------------------------------------------------
def _llama_fused_kernel(pos2_ref, h0_ref, wattn_ref, wo_ref, wgu_ref, wd_ref,
                        h_ref, res_ref, *, mlp_size):
    """One grid step == one LlamaDecoderLayer.

    h_ref   : output block (same block index every step) -> acts as the
              hidden_states carry, resident in VMEM across layers.
    res_ref : VMEM scratch carrying the residual across layers.
    """
    l = pl.program_id(0)

    # ---- residual handling at the top of the decoder layer ----------------
    @pl.when(l == 0)
    def _():
        h0 = h0_ref[...]
        res_ref[...] = h0              # residual-is-None path
        h_ref[...] = h0 + 1.0

    @pl.when(l > 0)
    def _():
        h = h_ref[...] + res_ref[...]
        res_ref[...] = h
        h_ref[...] = h + 1.0

    h = h_ref[...]                     # f32 [T, H]

    # ---- attention: q + k + v == h @ (Wq+Wk+Wv)^T + 2*positions ------------
    attn = jnp.dot(h.astype(jnp.bfloat16), wattn_ref[0],
                   preferred_element_type=jnp.float32) + pos2_ref[...]
    h = jnp.dot(attn.astype(jnp.bfloat16), wo_ref[0],
                preferred_element_type=jnp.float32)

    h = h + res_ref[...]
    res_ref[...] = h
    h = h + 1.0

    # ---- MLP: gate * relu(up) @ Wd ------------------------------------------
    gu = jnp.dot(h.astype(jnp.bfloat16), wgu_ref[0],
                 preferred_element_type=jnp.float32)        # [T, 2M]
    x = gu[:, :mlp_size] * jnp.maximum(gu[:, mlp_size:], 0.0)
    h_ref[...] = jnp.dot(x.astype(jnp.bfloat16), wd_ref[0],
                         preferred_element_type=jnp.float32)


def llama_model(prep, embedding, input_ids, positions):
    """Fused forward pass. `prep` holds the stacked, pre-transposed bf16 weights."""
    # glue: embedding gather stays in XLA (table lookup, not a kernel hot-path)
    h0 = jnp.take(embedding, input_ids, axis=0)              # [T, H] f32
    T, H = h0.shape
    L = prep["w_attn"].shape[0]
    M = prep["w_d"].shape[1]

    # lane-dense 2*positions term (q and k each add pos; v does not)
    pos2 = jnp.broadcast_to(
        (2.0 * positions.astype(jnp.float32))[:, None], (T, H))

    kernel = functools.partial(_llama_fused_kernel, mlp_size=M)
    grid_spec = pltpu.PrefetchScalarGridSpec(
        num_scalar_prefetch=0,
        grid=(L,),
        in_specs=[
            pl.BlockSpec((T, H), lambda l: (0, 0)),            # pos2 (loaded once)
            pl.BlockSpec((T, H), lambda l: (0, 0)),            # h0   (loaded once)
            pl.BlockSpec((1, H, H), lambda l: (l, 0, 0)),      # (Wq+Wk+Wv)^T
            pl.BlockSpec((1, H, H), lambda l: (l, 0, 0)),      # Wo^T
            pl.BlockSpec((1, H, 2 * M), lambda l: (l, 0, 0)),  # Wgu^T
            pl.BlockSpec((1, M, H), lambda l: (l, 0, 0)),      # Wd^T
        ],
        out_specs=pl.BlockSpec((T, H), lambda l: (0, 0)),      # resident h carry
        scratch_shapes=[pltpu.VMEM((T, H), jnp.float32)],      # residual carry
    )
    return pl.pallas_call(
        kernel,
        out_shape=jax.ShapeDtypeStruct((T, H), jnp.float32),
        grid_spec=grid_spec,
        compiler_params=pltpu.CompilerParams(
            dimension_semantics=("arbitrary",)),               # sequential carry
    )(pos2, h0, prep["w_attn"], prep["w_o"], prep["w_gu"], prep["w_d"])


# ----------------------------------------------------------------------------
# Parameter init (synthetic, deterministic) + one-time weight preparation
# ----------------------------------------------------------------------------
def init_params(key, *, hidden_size, mlp_size, vocab_size, num_layers,
                init_value=1.0, gain=0.001):
    """Torch-layout f32 params ([out_features, in_features] weights)."""
    def xavier(k, out_f, in_f):
        std = gain * (2.0 / (in_f + out_f)) ** 0.5
        return std * jax.random.normal(k, (out_f, in_f), jnp.float32)

    params = {
        "embedding": jnp.full((vocab_size, hidden_size), init_value, jnp.float32),
        "layers": [],
    }
    for _ in range(num_layers):
        key, k1, k2, k3, k4 = jax.random.split(key, 5)
        params["layers"].append({
            "wqkv": xavier(k1, 3 * hidden_size, hidden_size),   # [3H, H]
            "wo":   xavier(k2, hidden_size, hidden_size),       # [H, H]
            "wgu":  xavier(k3, 2 * mlp_size, hidden_size),      # [2M, H]
            "wd":   xavier(k4, hidden_size, mlp_size),          # [H, M]
        })
    return params


def prepare_weights(params):
    """One-time: fold Wq+Wk+Wv, transpose to [in, out], stack per layer, cast bf16."""
    H = params["layers"][0]["wqkv"].shape[1]
    w_attn, w_o, w_gu, w_d = [], [], [], []
    for layer in params["layers"]:
        wqkv = layer["wqkv"]
        w_sum = wqkv[:H] + wqkv[H:2 * H] + wqkv[2 * H:]         # [H, H]
        w_attn.append(w_sum.T)
        w_o.append(layer["wo"].T)
        w_gu.append(layer["wgu"].T)
        w_d.append(layer["wd"].T)
    return {
        "w_attn": jnp.stack(w_attn).astype(jnp.bfloat16),        # [L, H, H]
        "w_o":    jnp.stack(w_o).astype(jnp.bfloat16),           # [L, H, H]
        "w_gu":   jnp.stack(w_gu).astype(jnp.bfloat16),          # [L, H, 2M]
        "w_d":    jnp.stack(w_d).astype(jnp.bfloat16),           # [L, M, H]
    }


# ----------------------------------------------------------------------------
# References
# ----------------------------------------------------------------------------
def llama_ref_f32(params, input_ids, positions):
    """Pure-f32 reference, mirrors the PyTorch forward exactly (unfolded weights)."""
    h = jnp.take(params["embedding"], input_ids, axis=0)
    pos = positions.astype(jnp.float32)[:, None]
    res = None
    for layer in params["layers"]:
        if res is None:
            res = h
            h = h + 1.0
        else:
            h = h + res
            res = h
            h = h + 1.0
        qkv = h @ layer["wqkv"].T
        H = h.shape[-1]
        q = qkv[:, :H] + pos
        k = qkv[:, H:2 * H] + pos
        v = qkv[:, 2 * H:]
        h = (q + k + v) @ layer["wo"].T
        h = h + res
        res = h
        h = h + 1.0
        gu = h @ layer["wgu"].T
        M = gu.shape[-1] // 2
        h = (gu[:, :M] * jnp.maximum(gu[:, M:], 0.0)) @ layer["wd"].T
    return h


def llama_ref_matched(prep, embedding, input_ids, positions):
    """Same math / precision policy as the kernel (bf16 matmul inputs, f32 accum)."""
    h = jnp.take(embedding, input_ids, axis=0)
    T, H = h.shape
    pos2 = jnp.broadcast_to(
        (2.0 * positions.astype(jnp.float32))[:, None], (T, H))
    L = prep["w_attn"].shape[0]
    M = prep["w_d"].shape[1]
    res = None
    for l in range(L):
        if res is None:
            res = h
            h = h + 1.0
        else:
            h = h + res
            res = h
            h = h + 1.0
        attn = jnp.dot(h.astype(jnp.bfloat16), prep["w_attn"][l],
                       preferred_element_type=jnp.float32) + pos2
        h = jnp.dot(attn.astype(jnp.bfloat16), prep["w_o"][l],
                    preferred_element_type=jnp.float32)
        h = h + res
        res = h
        h = h + 1.0
        gu = jnp.dot(h.astype(jnp.bfloat16), prep["w_gu"][l],
                     preferred_element_type=jnp.float32)
        x = gu[:, :M] * jnp.maximum(gu[:, M:], 0.0)
        h = jnp.dot(x.astype(jnp.bfloat16), prep["w_d"][l],
                    preferred_element_type=jnp.float32)
    return h


# ----------------------------------------------------------------------------
if __name__ == "__main__":
    hidden_size, mlp_size, vocab_size, num_layers = 128, 256, 128, 2
    T = 8  # tokens

    key = jax.random.PRNGKey(0)
    key, pkey, ikey = jax.random.split(key, 3)
    input_ids = jax.random.randint(ikey, (T,), 0, vocab_size, dtype=jnp.int32)
    positions = jnp.arange(T, dtype=jnp.int32)

    run = jax.jit(llama_model)

    # (1) faithful config: gain=0.001 / init_value=1.0 (as in the PyTorch test)
    params = init_params(pkey, hidden_size=hidden_size, mlp_size=mlp_size,
                         vocab_size=vocab_size, num_layers=num_layers,
                         init_value=1.0, gain=0.001)
    prep = prepare_weights(params)
    out = jax.block_until_ready(run(prep, params["embedding"], input_ids, positions))
    assert out.shape == (T, hidden_size) and out.dtype == jnp.float32
    ref_m = llama_ref_matched(prep, params["embedding"], input_ids, positions)
    ref32 = llama_ref_f32(params, input_ids, positions)
    assert jnp.allclose(out, ref_m, atol=1e-6, rtol=1e-4), "mismatch vs matched-precision ref"
    assert jnp.allclose(out, ref32, atol=1e-4, rtol=1e-2), "mismatch vs f32 ref"

    # (2) larger-gain params so the numerical check exercises non-trivial magnitudes
    params2 = init_params(jax.random.PRNGKey(1), hidden_size=hidden_size,
                          mlp_size=mlp_size, vocab_size=vocab_size,
                          num_layers=num_layers, init_value=1.0, gain=0.5)
    prep2 = prepare_weights(params2)
    out2 = jax.block_until_ready(run(prep2, params2["embedding"], input_ids, positions))
    ref_m2 = llama_ref_matched(prep2, params2["embedding"], input_ids, positions)
    assert jnp.allclose(out2, ref_m2, rtol=1e-2, atol=1e-2), "mismatch (stress check)"

    print("KERNEL_OK")
</pallas_src>

<mosaic_0001>
module attributes {stable_mosaic.version = 11 : i64} {
  func.func @_llama_fused_kernel(%arg0: i32, %arg1: memref<8x128xf32, #tpu.memory_space<vmem>>, %arg2: memref<8x128xf32, #tpu.memory_space<vmem>>, %arg3: memref<1x128x128xbf16, #tpu.memory_space<vmem>>, %arg4: memref<1x128x128xbf16, #tpu.memory_space<vmem>>, %arg5: memref<1x128x512xbf16, #tpu.memory_space<vmem>>, %arg6: memref<1x256x128xbf16, #tpu.memory_space<vmem>>, %arg7: memref<8x128xf32, #tpu.memory_space<vmem>>, %arg8: memref<8x128xf32, #tpu.memory_space<vmem>>) attributes {dimension_semantics = [#tpu.dimension_semantics<arbitrary>], iteration_bounds = array<i64: 2>, scalar_prefetch = 0 : i64, scratch_operands = 1 : i64, tpu.core_type = #tpu.core_type<tc>, window_params = [{pipeline_mode = #tpu.pipeline_mode<synchronous>, transform_indices = @transform_0, window_bounds = array<i64: 8, 128>}, {pipeline_mode = #tpu.pipeline_mode<synchronous>, transform_indices = @transform_1, window_bounds = array<i64: 8, 128>}, {transform_indices = @transform_2, window_bounds = array<i64: 1, 128, 128>}, {transform_indices = @transform_3, window_bounds = array<i64: 1, 128, 128>}, {transform_indices = @transform_4, window_bounds = array<i64: 1, 128, 512>}, {transform_indices = @transform_5, window_bounds = array<i64: 1, 256, 128>}, {pipeline_mode = #tpu.pipeline_mode<synchronous>, transform_indices = @transform_6, window_bounds = array<i64: 8, 128>}]} {
    %c0_i32 = arith.constant 0 : i32
    %0 = arith.cmpi eq, %arg0, %c0_i32 : i32
    %1 = arith.extui %0 : i1 to i32
    %c0_i32_0 = arith.constant 0 : i32
    %2 = arith.cmpi ne, %1, %c0_i32_0 : i32
    scf.if %2 {
      %c0_29 = arith.constant 0 : index
      %c0_30 = arith.constant 0 : index
      %36 = vector.load %arg2[%c0_29, %c0_30] : memref<8x128xf32, #tpu.memory_space<vmem>>, vector<8x128xf32>
      %c0_31 = arith.constant 0 : index
      %c0_32 = arith.constant 0 : index
      %37 = vector.load %arg8[%c0_31, %c0_32] : memref<8x128xf32, #tpu.memory_space<vmem>>, vector<8x128xf32>
      tpu.vector_store %arg8[%c0_31, %c0_32], %36 {strides = array<i32>} : memref<8x128xf32, #tpu.memory_space<vmem>>, vector<8x128xf32>,
      %cst_33 = arith.constant 1.000000e+00 : f32
      %38 = vector.broadcast %cst_33 : f32 to vector<8x128xf32>
      %39 = arith.addf %36, %38 : vector<8x128xf32>
      %c0_34 = arith.constant 0 : index
      %c0_35 = arith.constant 0 : index
      %40 = vector.load %arg7[%c0_34, %c0_35] : memref<8x128xf32, #tpu.memory_space<vmem>>, vector<8x128xf32>
      tpu.vector_store %arg7[%c0_34, %c0_35], %39 {strides = array<i32>} : memref<8x128xf32, #tpu.memory_space<vmem>>, vector<8x128xf32>,
    } else {
    }
    %c0_i32_1 = arith.constant 0 : i32
    %3 = arith.cmpi sgt, %arg0, %c0_i32_1 : i32
    %4 = arith.extui %3 : i1 to i32
    %c0_i32_2 = arith.constant 0 : i32
    %5 = arith.cmpi ne, %4, %c0_i32_2 : i32
    scf.if %5 {
      %c0_29 = arith.constant 0 : index
      %c0_30 = arith.constant 0 : index
      %36 = vector.load %arg7[%c0_29, %c0_30] : memref<8x128xf32, #tpu.memory_space<vmem>>, vector<8x128xf32>
      %c0_31 = arith.constant 0 : index
      %c0_32 = arith.constant 0 : index
      %37 = vector.load %arg8[%c0_31, %c0_32] : memref<8x128xf32, #tpu.memory_space<vmem>>, vector<8x128xf32>
      %38 = arith.addf %36, %37 : vector<8x128xf32>
      %c0_33 = arith.constant 0 : index
      %c0_34 = arith.constant 0 : index
      %39 = vector.load %arg8[%c0_33, %c0_34] : memref<8x128xf32, #tpu.memory_space<vmem>>, vector<8x128xf32>
      tpu.vector_store %arg8[%c0_33, %c0_34], %38 {strides = array<i32>} : memref<8x128xf32, #tpu.memory_space<vmem>>, vector<8x128xf32>,
      %cst_35 = arith.constant 1.000000e+00 : f32
      %40 = vector.broadcast %cst_35 : f32 to vector<8x128xf32>
      %41 = arith.addf %38, %40 : vector<8x128xf32>
      %c0_36 = arith.constant 0 : index
      %c0_37 = arith.constant 0 : index
      %42 = vector.load %arg7[%c0_36, %c0_37] : memref<8x128xf32, #tpu.memory_space<vmem>>, vector<8x128xf32>
      tpu.vector_store %arg7[%c0_36, %c0_37], %41 {strides = array<i32>} : memref<8x128xf32, #tpu.memory_space<vmem>>, vector<8x128xf32>,
    } else {
    }
    %c0 = arith.constant 0 : index
    %c0_3 = arith.constant 0 : index
    %6 = vector.load %arg7[%c0, %c0_3] : memref<8x128xf32, #tpu.memory_space<vmem>>, vector<8x128xf32>
    %7 = arith.truncf %6 : vector<8x128xf32> to vector<8x128xbf16>
    %c0_4 = arith.constant 0 : index
    %c0_5 = arith.constant 0 : index
    %c0_6 = arith.constant 0 : index
    %8 = vector.load %arg3[%c0_4, %c0_5, %c0_6] : memref<1x128x128xbf16, #tpu.memory_space<vmem>>, vector<1x128x128xbf16>
    %9 = vector.shape_cast %8 : vector<1x128x128xbf16> to vector<128x128xbf16>
    %cst = arith.constant dense<0.000000e+00> : vector<8x128xf32>
    %10 = tpu.matmul %7, %9, %cst {dimension_numbers = #tpu.dot_dimension_numbers<[1], [0], [0], [1], [0, 0, 1, 1], [], []>} : vector<8x128xbf16>, vector<128x128xbf16>, vector<8x128xf32> -> vector<8x128xf32>
    %c0_7 = arith.constant 0 : index
    %c0_8 = arith.constant 0 : index
    %11 = vector.load %arg1[%c0_7, %c0_8] : memref<8x128xf32, #tpu.memory_space<vmem>>, vector<8x128xf32>
    %12 = arith.addf %10, %11 : vector<8x128xf32>
    %13 = arith.truncf %12 : vector<8x128xf32> to vector<8x128xbf16>
    %c0_9 = arith.constant 0 : index
    %c0_10 = arith.constant 0 : index
    %c0_11 = arith.constant 0 : index
    %14 = vector.load %arg4[%c0_9, %c0_10, %c0_11] : memref<1x128x128xbf16, #tpu.memory_space<vmem>>, vector<1x128x128xbf16>
    %15 = vector.shape_cast %14 : vector<1x128x128xbf16> to vector<128x128xbf16>
    %cst_12 = arith.constant dense<0.000000e+00> : vector<8x128xf32>
    %16 = tpu.matmul %13, %15, %cst_12 {dimension_numbers = #tpu.dot_dimension_numbers<[1], [0], [0], [1], [0, 0, 1, 1], [], []>} : vector<8x128xbf16>, vector<128x128xbf16>, vector<8x128xf32> -> vector<8x128xf32>
    %c0_13 = arith.constant 0 : index
    %c0_14 = arith.constant 0 : index
    %17 = vector.load %arg8[%c0_13, %c0_14] : memref<8x128xf32, #tpu.memory_space<vmem>>, vector<8x128xf32>
    %18 = arith.addf %16, %17 : vector<8x128xf32>
    %c0_15 = arith.constant 0 : index
    %c0_16 = arith.constant 0 : index
    %19 = vector.load %arg8[%c0_15, %c0_16] : memref<8x128xf32, #tpu.memory_space<vmem>>, vector<8x128xf32>
    tpu.vector_store %arg8[%c0_15, %c0_16], %18 {strides = array<i32>} : memref<8x128xf32, #tpu.memory_space<vmem>>, vector<8x128xf32>,
    %cst_17 = arith.constant 1.000000e+00 : f32
    %20 = vector.broadcast %cst_17 : f32 to vector<8x128xf32>
    %21 = arith.addf %18, %20 : vector<8x128xf32>
    %22 = arith.truncf %21 : vector<8x128xf32> to vector<8x128xbf16>
    %c0_18 = arith.constant 0 : index
    %c0_19 = arith.constant 0 : index
    %c0_20 = arith.constant 0 : index
    %23 = vector.load %arg5[%c0_18, %c0_19, %c0_20] : memref<1x128x512xbf16, #tpu.memory_space<vmem>>, vector<1x128x512xbf16>
    %24 = vector.shape_cast %23 : vector<1x128x512xbf16> to vector<128x512xbf16>
    %cst_21 = arith.constant dense<0.000000e+00> : vector<8x512xf32>
    %25 = tpu.matmul %22, %24, %cst_21 {dimension_numbers = #tpu.dot_dimension_numbers<[1], [0], [0], [1], [0, 0, 1, 1], [], []>} : vector<8x128xbf16>, vector<128x512xbf16>, vector<8x512xf32> -> vector<8x512xf32>
    %26 = vector.extract_strided_slice %25 {offsets = [0, 0], sizes = [8, 256], strides = [1, 1]} : vector<8x512xf32> to vector<8x256xf32>
    %27 = vector.extract_strided_slice %25 {offsets = [0, 256], sizes = [8, 256], strides = [1, 1]} : vector<8x512xf32> to vector<8x256xf32>
    %cst_22 = arith.constant 0.000000e+00 : f32
    %28 = vector.broadcast %cst_22 : f32 to vector<8x256xf32>
    %29 = arith.maximumf %27, %28 : vector<8x256xf32>
    %30 = arith.mulf %26, %29 : vector<8x256xf32>
    %31 = arith.truncf %30 : vector<8x256xf32> to vector<8x256xbf16>
    %c0_23 = arith.constant 0 : index
    %c0_24 = arith.constant 0 : index
    %c0_25 = arith.constant 0 : index
    %32 = vector.load %arg6[%c0_23, %c0_24, %c0_25] : memref<1x256x128xbf16, #tpu.memory_space<vmem>>, vector<1x256x128xbf16>
    %33 = vector.shape_cast %32 : vector<1x256x128xbf16> to vector<256x128xbf16>
    %cst_26 = arith.constant dense<0.000000e+00> : vector<8x128xf32>
    %34 = tpu.matmul %31, %33, %cst_26 {dimension_numbers = #tpu.dot_dimension_numbers<[1], [0], [0], [1], [0, 0, 1, 1], [], []>} : vector<8x256xbf16>, vector<256x128xbf16>, vector<8x128xf32> -> vector<8x128xf32>
    %c0_27 = arith.constant 0 : index
    %c0_28 = arith.constant 0 : index
    %35 = vector.load %arg7[%c0_27, %c0_28] : memref<8x128xf32, #tpu.memory_space<vmem>>, vector<8x128xf32>
    tpu.vector_store %arg7[%c0_27, %c0_28], %34 {strides = array<i32>} : memref<8x128xf32, #tpu.memory_space<vmem>>, vector<8x128xf32>,
    return
  }
  func.func @transform_0(%arg0: i32) -> (i32, i32) {
    %c0_i32 = arith.constant 0 : i32
    %c0_i32_0 = arith.constant 0 : i32
    %c0_i32_1 = arith.constant 0 : i32
    return %c0_i32, %c0_i32_0 : i32, i32
  }
  func.func @transform_1(%arg0: i32) -> (i32, i32) {
    %c0_i32 = arith.constant 0 : i32
    %c0_i32_0 = arith.constant 0 : i32
    %c0_i32_1 = arith.constant 0 : i32
    return %c0_i32, %c0_i32_0 : i32, i32
  }
  func.func @transform_2(%arg0: i32) -> (i32, i32, i32) {
    %c0_i32 = arith.constant 0 : i32
    %c0_i32_0 = arith.constant 0 : i32
    %c0_i32_1 = arith.constant 0 : i32
    return %arg0, %c0_i32, %c0_i32_0 : i32, i32, i32
  }
  func.func @transform_3(%arg0: i32) -> (i32, i32, i32) {
    %c0_i32 = arith.constant 0 : i32
    %c0_i32_0 = arith.constant 0 : i32
    %c0_i32_1 = arith.constant 0 : i32
    return %arg0, %c0_i32, %c0_i32_0 : i32, i32, i32
  }
  func.func @transform_4(%arg0: i32) -> (i32, i32, i32) {
    %c0_i32 = arith.constant 0 : i32
    %c0_i32_0 = arith.constant 0 : i32
    %c0_i32_1 = arith.constant 0 : i32
    return %arg0, %c0_i32, %c0_i32_0 : i32, i32, i32
  }
  func.func @transform_5(%arg0: i32) -> (i32, i32, i32) {
    %c0_i32 = arith.constant 0 : i32
    %c0_i32_0 = arith.constant 0 : i32
    %c0_i32_1 = arith.constant 0 : i32
    return %arg0, %c0_i32, %c0_i32_0 : i32, i32, i32
  }
  func.func @transform_6(%arg0: i32) -> (i32, i32) {
    %c0_i32 = arith.constant 0 : i32
    %c0_i32_0 = arith.constant 0 : i32
    %c0_i32_1 = arith.constant 0 : i32
    return %c0_i32, %c0_i32_0 : i32, i32
  }
}

</mosaic_0001>

<llo_original>
// kernel: llama_model.1
$region0: #{llama_model.1}
  #allocation0 [shape = 'u32[]', space=smem, size = 0x4, offset = 0x4, fixed_abs, tag = 'smem constant byte address 0x4 - core index']
  #allocation1 [shape = 'u32[144,128]{1,0:T(1,128)}', space=vmem, size = 0x12000, scoped, tag = 'internal scratch']
  #allocation2 [shape = 'f32[8,128]{1,0:T(8,128)}', space=vmem, size = 0x1000, scoped, tag = 'scratch operand']
  %s0 = inlined_call_operand.vmem [shape: f32[8,128], index: 0, kind: input, shape index: {}]
  %s1 = inlined_call_operand.vmem [shape: f32[8,128], index: 1, kind: input, shape index: {}]
  %s2 = inlined_call_operand.hbm [shape: bf16[2,128,128], index: 2, kind: input, shape index: {}]
  %s3 = inlined_call_operand.vmem [shape: bf16[2,128,128], index: 3, kind: input, shape index: {}]
  %s4 = inlined_call_operand.hbm [shape: bf16[2,128,512], index: 4, kind: input, shape index: {}]
  %s5 = inlined_call_operand.hbm [shape: bf16[2,256,128], index: 5, kind: input, shape index: {}]
  %s6 = inlined_call_operand.hbm [shape: f32[8,128], index: 6, kind: output, shape index: {}]
  %s7 = sld [smem:[#allocation0]]
  $region77: #{llama_model.1} parent=0
    _
  %s9 = ssub.s32 1, %s7
  %s10 = scalar_select 0, %s9, %s7
  $region1: #{llama_model.1} parent=0
    #allocation3 [shape = 'u8[65536]{0}', space=vmem, size = 0x10000, scoped, tag = 'input window, operand 2']
    #allocation4 [shape = 's32[2]{0}', space=sflag, size = 0x8, scoped, tag = 'scoped memory for llama_model.1']
    #allocation5 [shape = 's32[2]{0}', space=sflag, size = 0x8, scoped, tag = 'scoped memory for llama_model.1']
    #allocation6 [shape = 'u8[262144]{0}', space=vmem, size = 0x40000, scoped, tag = 'input window, operand 4']
    #allocation7 [shape = 's32[2]{0}', space=sflag, size = 0x8, scoped, tag = 'scoped memory for llama_model.1']
    #allocation8 [shape = 'u8[131072]{0}', space=vmem, size = 0x20000, scoped, tag = 'input window, operand 5']
    #allocation9 [shape = 'u8[4096]{0}', space=vmem, size = 0x1000, scoped, tag = 'output window, operand 0, single buffered']
    %11 = vsyncpa [#allocation4], 0
    %s12 = scalar_lea.sflag [#allocation4], 1
    %13 = vsyncpa %s12, 0
    %14 = vsyncpa [#allocation7], 0
    %s15 = scalar_lea.sflag [#allocation7], 1
    %16 = vsyncpa %s15, 0
    %17 = vsyncpa [#allocation5], 0
    loop: start=0, step=1, limit=4
    $region2: #{llama_model.1} parent=1 // loop_pre_header
      _
    $region3: #{llama_model.1} parent=1 // loop_header
      %s19 = sphi 0, %s23
      %p20 = scmp.ge.s32.totalorder %s19, 4
      %s27 = sphi 0, %s27
      %s29 = sphi 0, %s27
      %s30 = sphi 0, %s29
      %s44 = sphi 0, %s30
      %s48 = sphi 0, %s48
      %s50 = sphi 0, %s48
      %s51 = sphi 0, %s50
      %s65 = sphi 0, %s51
      %s71 = sphi 0, %s73
      %s74 = sphi 0, %s71
      %s75 = sphi 0, %s74
      %s91 = sphi 0, %s75
      %s97 = sphi 0, %s99
      %s100 = sphi 0, %s97
      %s101 = sphi 0, %s100
      %s117 = sphi 0, %s101
      %s123 = sphi 0, %s125
      %s126 = sphi 0, %s123
      %s127 = sphi 0, %s126
      %s143 = sphi 0, %s127
      %s149 = sphi 0, %s151
      %s152 = sphi 0, %s149
      %s153 = sphi 0, %s152
      %s169 = sphi 0, %s153
      %s173 = sphi 0, %s173
      %s175 = sphi 0, %s173
      %s176 = sphi 0, %s175
      %s190 = sphi 0, %s176
    $region4: #{llama_model.1} parent=1 // loop_header_branch
      %22 = sbr.rel (%p20) target = $region8
    $region5: #{llama_model.1} parent=1 // loop_body
      %s24 = ssub.s32 %s19, 1
      %s25 = ssub.s32 %s19, 2
      %s26 = sadd.s32 %s19, 1
      %s28 = sadd.s32 %s27, 1
      %p31 = scmp.eq.s32.totalorder %s19, 1
      %p32 = scmp.ne.s32.totalorder %s27, %s29
      %p33 = scmp.eq.s32.totalorder %s19, 0
      %p34 = por %p32, %p33
      %p35 = scmp.ne.s32.totalorder %s27, %s29
      %p36 = scmp.eq.s32.totalorder %s24, 1
      %p37 = por %p35, %p36
      %p38 = scmp.ne.s32.totalorder %s29, %s30
      %p39 = scmp.eq.s32.totalorder %s24, 0
      %p40 = por %p38, %p39
      %p41 = scmp.ne.s32.totalorder %s29, %s30
      %p42 = scmp.eq.s32.totalorder %s25, 1
      %p43 = por %p41, %p42
      %p45 = scmp.ne.s32.totalorder %s30, %s44
      %p46 = scmp.eq.s32.totalorder %s25, 0
      %p47 = por %p45, %p46
      %s49 = sadd.s32 %s48, 1
      %p52 = scmp.eq.s32.totalorder %s19, 1
      %p53 = scmp.ne.s32.totalorder %s48, %s50
      %p54 = scmp.eq.s32.totalorder %s19, 0
      %p55 = por %p53, %p54
      %p56 = scmp.ne.s32.totalorder %s48, %s50
      %p57 = scmp.eq.s32.totalorder %s24, 1
      %p58 = por %p56, %p57
      %p59 = scmp.ne.s32.totalorder %s50, %s51
      %p60 = scmp.eq.s32.totalorder %s24, 0
      %p61 = por %p59, %p60
      %p62 = scmp.ne.s32.totalorder %s50, %s51
      %p63 = scmp.eq.s32.totalorder %s25, 1
      %p64 = por %p62, %p63
      %p66 = scmp.ne.s32.totalorder %s51, %s65
      %p67 = scmp.eq.s32.totalorder %s25, 0
      %p68 = por %p66, %p67
      %s69 = ssub.s32 %s19, %s26
      %p70 = scmp.eq.s32.totalorder %s69, 0
      %s72 = sadd.s32 %s71, 1
      %s73 = scalar_select %p70, %s71, %s72
      %p76 = pneg %p70
      %p77 = scmp.eq.s32.totalorder %s19, 1
      %p78 = por %p76, %p77
      %p79 = scmp.ne.s32.totalorder %s71, %s74
      %p80 = scmp.eq.s32.totalorder %s19, 0
      %p81 = por %p79, %p80
      %p82 = scmp.ne.s32.totalorder %s71, %s74
      %p83 = scmp.eq.s32.totalorder %s24, 1
      %p84 = por %p82, %p83
      %p85 = scmp.ne.s32.totalorder %s74, %s75
      %p86 = scmp.eq.s32.totalorder %s24, 0
      %p87 = por %p85, %p86
      %p88 = scmp.ne.s32.totalorder %s74, %s75
      %p89 = scmp.eq.s32.totalorder %s25, 1
      %p90 = por %p88, %p89
      %p92 = scmp.ne.s32.totalorder %s75, %s91
      %p93 = scmp.eq.s32.totalorder %s25, 0
      %p94 = por %p92, %p93
      %s95 = ssub.s32 %s19, %s26
      %p96 = scmp.eq.s32.totalorder %s95, 0
      %s98 = sadd.s32 %s97, 1
      %s99 = scalar_select %p96, %s97, %s98
      %p102 = pneg %p96
      %p103 = scmp.eq.s32.totalorder %s19, 1
      %p104 = por %p102, %p103
      %p105 = scmp.ne.s32.totalorder %s97, %s100
      %p106 = scmp.eq.s32.totalorder %s19, 0
      %p107 = por %p105, %p106
      %p108 = scmp.ne.s32.totalorder %s97, %s100
      %p109 = scmp.eq.s32.totalorder %s24, 1
      %p110 = por %p108, %p109
      %p111 = scmp.ne.s32.totalorder %s100, %s101
      %p112 = scmp.eq.s32.totalorder %s24, 0
      %p113 = por %p111, %p112
      %p114 = scmp.ne.s32.totalorder %s100, %s101
      %p115 = scmp.eq.s32.totalorder %s25, 1
      %p116 = por %p114, %p115
      %p118 = scmp.ne.s32.totalorder %s101, %s117
      %p119 = scmp.eq.s32.totalorder %s25, 0
      %p120 = por %p118, %p119
      %s121 = ssub.s32 %s19, %s26
      %p122 = scmp.eq.s32.totalorder %s121, 0
      %s124 = sadd.s32 %s123, 1
      %s125 = scalar_select %p122, %s123, %s124
      %p128 = pneg %p122
      %p129 = scmp.eq.s32.totalorder %s19, 1
      %p130 = por %p128, %p129
      %p131 = scmp.ne.s32.totalorder %s123, %s126
      %p132 = scmp.eq.s32.totalorder %s19, 0
      %p133 = por %p131, %p132
      %p134 = scmp.ne.s32.totalorder %s123, %s126
      %p135 = scmp.eq.s32.totalorder %s24, 1
      %p136 = por %p134, %p135
      %p137 = scmp.ne.s32.totalorder %s126, %s127
      %p138 = scmp.eq.s32.totalorder %s24, 0
      %p139 = por %p137, %p138
      %p140 = scmp.ne.s32.totalorder %s126, %s127
      %p141 = scmp.eq.s32.totalorder %s25, 1
      %p142 = por %p140, %p141
      %p144 = scmp.ne.s32.totalorder %s127, %s143
      %p145 = scmp.eq.s32.totalorder %s25, 0
      %p146 = por %p144, %p145
      %s147 = ssub.s32 %s19, %s26
      %p148 = scmp.eq.s32.totalorder %s147, 0
      %s150 = sadd.s32 %s149, 1
      %s151 = scalar_select %p148, %s149, %s150
      %p154 = pneg %p148
      %p155 = scmp.eq.s32.totalorder %s19, 1
      %p156 = por %p154, %p155
      %p157 = scmp.ne.s32.totalorder %s149, %s152
      %p158 = scmp.eq.s32.totalorder %s19, 0
      %p159 = por %p157, %p158
      %p160 = scmp.ne.s32.totalorder %s149, %s152
      %p161 = scmp.eq.s32.totalorder %s24, 1
      %p162 = por %p160, %p161
      %p163 = scmp.ne.s32.totalorder %s152, %s153
      %p164 = scmp.eq.s32.totalorder %s24, 0
      %p165 = por %p163, %p164
      %p166 = scmp.ne.s32.totalorder %s152, %s153
      %p167 = scmp.eq.s32.totalorder %s25, 1
      %p168 = por %p166, %p167
      %p170 = scmp.ne.s32.totalorder %s153, %s169
      %p171 = scmp.eq.s32.totalorder %s25, 0
      %p172 = por %p170, %p171
      %s174 = sadd.s32 %s173, 1
      %p177 = scmp.eq.s32.totalorder %s19, 1
      %p178 = scmp.ne.s32.totalorder %s173, %s175
      %p179 = scmp.eq.s32.totalorder %s19, 0
      %p180 = por %p178, %p179
      %p181 = scmp.ne.s32.totalorder %s173, %s175
      %p182 = scmp.eq.s32.totalorder %s24, 1
      %p183 = por %p181, %p182
      %p184 = scmp.ne.s32.totalorder %s175, %s176
      %p185 = scmp.eq.s32.totalorder %s24, 0
      %p186 = por %p184, %p185
      %p187 = scmp.ne.s32.totalorder %s175, %s176
      %p188 = scmp.eq.s32.totalorder %s25, 1
      %p189 = por %p187, %p188
      %p191 = scmp.ne.s32.totalorder %s176, %s190
      %p192 = scmp.eq.s32.totalorder %s25, 0
      %p193 = por %p191, %p192
      %p194 = scmp.le.s32.totalorder 1, %s19
      %p195 = scmp.lt.s32.totalorder %s19, 3
      %p196 = pnand %p194, %p195
      %p197 = pneg %p196
      // Predicated region
      $region9: #{llama_model.1} parent=5 // pred_check
        _
      $region10: #{llama_model.1} parent=5 // pred_check_branch
        %199 = sbr.rel (%p196) target = $region12
      $region11: #{llama_model.1} parent=5 // pred_region
        %s200 = ssub.s32 %s19, 1
        // Predicated region
        $region13: #{llama_model.1} parent=11 // pred_check
          %p201 = pneg %p40
        $region14: #{llama_model.1} parent=11 // pred_check_branch
          %203 = sbr.rel (%p201) target = $region16
        $region15: #{llama_model.1} parent=11 // pred_region
          _
        $region16: #{llama_model.1} parent=11 // pred_fallthru
          _
        // Predicated region
        $region17: #{llama_model.1} parent=11 // pred_check
          %p204 = pneg %p61
        $region18: #{llama_model.1} parent=11 // pred_check_branch
          %206 = sbr.rel (%p204) target = $region20
        $region19: #{llama_model.1} parent=11 // pred_region
          _
        $region20: #{llama_model.1} parent=11 // pred_fallthru
          _
      $region12: #{llama_model.1} parent=5 // pred_fallthru
        _
      %p207 = scmp.lt.s32.totalorder %s19, 2
      // Predicated region
      $region21: #{llama_model.1} parent=5 // pred_check
        %p208 = pneg %p207
      $region22: #{llama_model.1} parent=5 // pred_check_branch
        %210 = sbr.rel (%p208) target = $region24
      $region23: #{llama_model.1} parent=5 // pred_region
        // Predicated region
        $region25: #{llama_model.1} parent=23 // pred_check
          %p211 = pneg %p81
        $region26: #{llama_model.1} parent=23 // pred_check_branch
          %213 = sbr.rel (%p211) target = $region28
        $region27: #{llama_model.1} parent=23 // pred_region
          %s214 = sand.u32 %s71, 1
          %s215 = scalar_lea.sflag [#allocation4], %s214
          %s216 = sand.u32 %s71, 1
          %s217 = smul.addr %s216, 64
          %s218 = scalar_lea.vmem [#allocation3], %s217
          %s220 = ssub.s32 1024, 1024
          %221 = vsyncadd %s215, %s220
          %s222 = smul.addr %s19, 16
          %s223 = smul.addr %s222, 64
          %s224 = scalar_lea.hbm %s2, %s223
          %s225 = sshll.u32 %s218, 4
          %s226 = int_to_ptr.vmem [resolvable:$true] %s225
          %231 = dma.hbm_to_vmem [thread:$0]  %s224, 1024, %s226, %s215, 64, 64, 4
        $region28: #{llama_model.1} parent=23 // pred_fallthru
          _
        // Predicated region
        $region29: #{llama_model.1} parent=23 // pred_check
          %p232 = pneg %p107
        $region30: #{llama_model.1} parent=23 // pred_check_branch
          %234 = sbr.rel (%p232) target = $region32
        $region31: #{llama_model.1} parent=23 // pred_region
          %p235 = scmp.lt.s32.totalorder %s19, 1
          %s236 = scalar_select %p235, %s19, 1
          %s237 = smul.addr %s236, 16
          %s238 = smul.addr %s237, 4
          %s239 = scalar_lea.vmem %s3, %s238
        $region32: #{llama_model.1} parent=23 // pred_fallthru
          _
        // Predicated region
        $region33: #{llama_model.1} parent=23 // pred_check
          %p240 = pneg %p133
        $region34: #{llama_model.1} parent=23 // pred_check_branch
          %242 = sbr.rel (%p240) target = $region36
        $region35: #{llama_model.1} parent=23 // pred_region
          %s243 = sand.u32 %s19, 1
          %s244 = scalar_lea.sflag [#allocation7], %s243
          %s245 = sand.u32 %s123, 1
          %s246 = smul.addr %s245, 256
          %s247 = scalar_lea.vmem [#allocation6], %s246
          %s249 = ssub.s32 4096, 4096
          %250 = vsyncadd %s244, %s249
          %s251 = smul.addr %s19, 64
          %s252 = smul.addr %s251, 64
          %s253 = scalar_lea.hbm %s4, %s252
          %s254 = sshll.u32 %s247, 4
          %s255 = int_to_ptr.vmem [resolvable:$true] %s254
          %260 = dma.hbm_to_vmem [thread:$0]  %s253, 4096, %s255, %s244, 256, 256, 16
        $region36: #{llama_model.1} parent=23 // pred_fallthru
          _
        // Predicated region
        $region37: #{llama_model.1} parent=23 // pred_check
          %p261 = pneg %p159
        $region38: #{llama_model.1} parent=23 // pred_check_branch
          %263 = sbr.rel (%p261) target = $region40
        $region39: #{llama_model.1} parent=23 // pred_region
          %s264 = sand.u32 %s19, 1
          %s265 = scalar_lea.sflag [#allocation7], %s264
          %s266 = sand.u32 %s149, 1
          %s267 = smul.addr %s266, 128
          %s268 = scalar_lea.vmem [#allocation8], %s267
          %s270 = ssub.s32 2048, 2048
          %271 = vsyncadd %s265, %s270
          %s272 = smul.addr %s19, 32
          %s273 = smul.addr %s272, 64
          %s274 = scalar_lea.hbm %s5, %s273
          %s275 = sshll.u32 %s268, 4
          %s276 = int_to_ptr.vmem [resolvable:$true] %s275
          %281 = dma.hbm_to_vmem [thread:$0]  %s274, 2048, %s276, %s265, 64, 64, 4
        $region40: #{llama_model.1} parent=23 // pred_fallthru
          _
      $region24: #{llama_model.1} parent=5 // pred_fallthru
        _
      %p282 = scmp.le.s32.totalorder 1, %s19
      %p283 = scmp.lt.s32.totalorder %s19, 3
      %p284 = pnand %p282, %p283
      %p285 = pneg %p284
      // Predicated region
      $region41: #{llama_model.1} parent=5 // pred_check
        _
      $region42: #{llama_model.1} parent=5 // pred_check_branch
        %287 = sbr.rel (%p284) target = $region44
      $region43: #{llama_model.1} parent=5 // pred_region
        %s288 = ssub.s32 %s19, 1
        %s289 = sand.u32 %s74, 1
        %s290 = scalar_lea.sflag [#allocation4], %s289
        %s291 = sand.u32 %s74, 1
        %s292 = smul.addr %s291, 64
        %s293 = scalar_lea.vmem [#allocation3], %s292
        // Predicated region
        $region45: #{llama_model.1} parent=43 // pred_check
          %p294 = pneg %p87
        $region46: #{llama_model.1} parent=43 // pred_check_branch
          %296 = sbr.rel (%p294) target = $region48
        $region47: #{llama_model.1} parent=43 // pred_region
          %297 = dma.done %s290, 1024
        $region48: #{llama_model.1} parent=43 // pred_fallthru
          _
        %s298 = sand.u32 %s24, 1
        %s299 = scalar_lea.sflag [#allocation7], %s298
        %s300 = sand.u32 %s126, 1
        %s301 = smul.addr %s300, 256
        %s302 = scalar_lea.vmem [#allocation6], %s301
        // Predicated region
        $region49: #{llama_model.1} parent=43 // pred_check
          %p303 = pneg %p139
        $region50: #{llama_model.1} parent=43 // pred_check_branch
          %305 = sbr.rel (%p303) target = $region52
        $region51: #{llama_model.1} parent=43 // pred_region
          %306 = dma.done %s299, 4096
        $region52: #{llama_model.1} parent=43 // pred_fallthru
          _
        %s307 = sand.u32 %s24, 1
        %s308 = scalar_lea.sflag [#allocation7], %s307
        %s309 = sand.u32 %s152, 1
        %s310 = smul.addr %s309, 128
        %s311 = scalar_lea.vmem [#allocation8], %s310
        // Predicated region
        $region53: #{llama_model.1} parent=43 // pred_check
          %p312 = pneg %p165
        $region54: #{llama_model.1} parent=43 // pred_check_branch
          %314 = sbr.rel (%p312) target = $region56
        $region55: #{llama_model.1} parent=43 // pred_region
          %315 = dma.done %s308, 2048
        $region56: #{llama_model.1} parent=43 // pred_fallthru
          _
        %p316 = pneg %p40
        %p317 = pneg %p37
        %p318 = pneg %p61
        %p319 = pneg %p58
        %s320 = sand.u32 %s74, 1
        %s321 = scalar_lea.sflag [#allocation4], %s320
        %s322 = sand.u32 %s74, 1
        %s323 = smul.addr %s322, 64
        %s324 = scalar_lea.vmem [#allocation3], %s323
        %p325 = pneg %p87
        %p326 = pneg %p84
        %p327 = scmp.lt.s32.totalorder %s24, 1
        %s328 = scalar_select %p327, %s24, 1
        %s329 = smul.addr %s328, 16
        %s330 = smul.addr %s329, 4
        %s331 = scalar_lea.vmem %s3, %s330
        %p332 = pneg %p113
        %p333 = pneg %p110
        %s334 = sand.u32 %s24, 1
        %s335 = scalar_lea.sflag [#allocation7], %s334
        %s336 = sand.u32 %s126, 1
        %s337 = smul.addr %s336, 256
        %s338 = scalar_lea.vmem [#allocation6], %s337
        %p339 = pneg %p139
        %p340 = pneg %p136
        %s341 = sand.u32 %s24, 1
        %s342 = scalar_lea.sflag [#allocation7], %s341
        %s343 = sand.u32 %s152, 1
        %s344 = smul.addr %s343, 128
        %s345 = scalar_lea.vmem [#allocation8], %s344
        %p346 = pneg %p165
        %p347 = pneg %p162
        %p348 = pneg %p186
        %p349 = pneg %p183
        %p350 = scmp.lt.s32.totalorder %s24, 1
        %s351 = scalar_select %p350, %s24, 1
        %s352 = smul.addr %s351, 16
        %s353 = smul.addr %s352, 4
        %s354 = scalar_lea.vmem %s3, %s353
        %p356 = scmp.eq.s32.totalorder %s24, 0
        // Predicated region
        $region57: #{llama_model.1} parent=43 // pred_check
          %p357 = pneg %p356
        $region58: #{llama_model.1} parent=43 // pred_check_branch
          %359 = sbr.rel (%p357) target = $region60
        $region59: #{llama_model.1} parent=43 // pred_region
          %v360 = vld [vmem:[%s1] sm:$0xff]
          %361 = vst [vmem:[#allocation2] sm:$0xff] %v360
          %v362 = vadd.f32 %v360, 1.0
          %363 = vst [vmem:[#allocation9] sm:$0xff] %v362
        $region60: #{llama_model.1} parent=43 // pred_fallthru
          _
        %p364 = scmp.gt.s32.totalorder %s24, 0
        // Predicated region
        $region61: #{llama_model.1} parent=43 // pred_check
          %p365 = pneg %p364
        $region62: #{llama_model.1} parent=43 // pred_check_branch
          %367 = sbr.rel (%p365) target = $region64
        $region63: #{llama_model.1} parent=43 // pred_region
          %v368 = vld [vmem:[#allocation9] sm:$0xff]
          %v369 = vld [vmem:[#allocation2] sm:$0xff]
          %v370 = vadd.f32 %v368, %v369
          %371 = vst [vmem:[#allocation2] sm:$0xff] %v370
          %v372 = vadd.f32 %v370, 1.0
          %373 = vst [vmem:[#allocation9] sm:$0xff] %v372
        $region64: #{llama_model.1} parent=43 // pred_fallthru
          _
        %v374 = vld [vmem:[#allocation9] sm:$0xff]
        %v375 = vpack.c.bf16 %v374, %v374
        %v376 = vld [vmem:[%s293] sm:$0xf]
        %v377 = vld [vmem:[%s293 + $0x4] sm:$0xf]
        %v378 = vld [vmem:[%s293 + $0x8] sm:$0xf]
        %v379 = vld [vmem:[%s293 + $0xc] sm:$0xf]
        %v380 = vld [vmem:[%s293 + $0x10] sm:$0xf]
        %v381 = vld [vmem:[%s293 + $0x14] sm:$0xf]
        %v382 = vld [vmem:[%s293 + $0x18] sm:$0xf]
        %v383 = vld [vmem:[%s293 + $0x1c] sm:$0xf]
        %v384 = vld [vmem:[%s293 + $0x20] sm:$0xf]
        %v385 = vld [vmem:[%s293 + $0x24] sm:$0xf]
        %v386 = vld [vmem:[%s293 + $0x28] sm:$0xf]
        %v387 = vld [vmem:[%s293 + $0x2c] sm:$0xf]
        %v388 = vld [vmem:[%s293 + $0x30] sm:$0xf]
        %v389 = vld [vmem:[%s293 + $0x34] sm:$0xf]
        %v390 = vld [vmem:[%s293 + $0x38] sm:$0xf]
        %v391 = vld [vmem:[%s293 + $0x3c] sm:$0xf]
        %v392 = vld [vmem:[%s0] sm:$0xff]
        %v409 = vunpack.c.l.b16 %v376
        %v410 = vunpack.c.l.b16 %v377
        %v411 = vunpack.c.l.b16 %v378
        %v412 = vunpack.c.l.b16 %v379
        %v413 = vunpack.c.l.b16 %v380
        %v414 = vunpack.c.l.b16 %v381
        %v415 = vunpack.c.l.b16 %v382
        %v416 = vunpack.c.l.b16 %v383
        %v417 = vunpack.c.l.b16 %v384
        %v418 = vunpack.c.l.b16 %v385
        %v419 = vunpack.c.l.b16 %v386
        %v420 = vunpack.c.l.b16 %v387
        %v421 = vunpack.c.l.b16 %v388
        %v422 = vunpack.c.l.b16 %v389
        %v423 = vunpack.c.l.b16 %v390
        %v424 = vunpack.c.l.b16 %v391
        %v425 = vpack.c.b16 %v410, %v409
        %v426 = vpack.c.b16 %v412, %v411
        %v427 = vpack.c.b16 %v414, %v413
        %v428 = vpack.c.b16 %v416, %v415
        %v429 = vpack.c.b16 %v418, %v417
        %v430 = vpack.c.b16 %v420, %v419
        %v431 = vpack.c.b16 %v422, %v421
        %v432 = vpack.c.b16 %v424, %v423
        %441 = vmatprep.subr.bf16.mxu0 0
        %442 = vmatpush1.bf16.msra.mxu0 %v425
        %443 = vmatprep.subr.bf16.mxu0 0
        %444 = vmatpush1.bf16.msra.mxu0 %v426
        %445 = vmatprep.subr.bf16.mxu0 0
        %446 = vmatpush1.bf16.msra.mxu0 %v427
        %447 = vmatprep.subr.bf16.mxu0 0
        %448 = vmatpush1.bf16.msra.mxu0 %v428
        %449 = vmatprep.subr.bf16.mxu0 0
        %450 = vmatpush1.bf16.msra.mxu0 %v429
        %451 = vmatprep.subr.bf16.mxu0 0
        %452 = vmatpush1.bf16.msra.mxu0 %v430
        %453 = vmatprep.subr.bf16.mxu0 0
        %454 = vmatpush1.bf16.msra.mxu0 %v431
        %455 = vmatprep.subr.bf16.mxu0 0
        %456 = vmatpush1.bf16.msra.mxu0 %v432
        %457 = vmatprep.subr.bf16.mxu0 0
        %458 = vmatpush1.bf16.msra.mxu0 0
        %459 = vmatprep.subr.bf16.mxu0 0
        %460 = vmatpush1.bf16.msra.mxu0 0
        %461 = vmatprep.subr.bf16.mxu0 0
        %462 = vmatpush1.bf16.msra.mxu0 0
        %463 = vmatprep.subr.bf16.mxu0 0
        %464 = vmatpush1.bf16.msra.mxu0 0
        %465 = vmatprep.subr.bf16.mxu0 0
        %466 = vmatpush1.bf16.msra.mxu0 0
        %467 = vmatprep.subr.bf16.mxu0 0
        %468 = vmatpush1.bf16.msra.mxu0 0
        %469 = vmatprep.subr.bf16.mxu0 0
        %470 = vmatpush1.bf16.msra.mxu0 0
        %471 = vmatprep.subr.bf16.mxu0 0
        %472 = vmatpush1.bf16.msra.mxu0 0
        %473 = vmatprep.mubr.bf16.mxu0 0
        %474 = vmatmul.mubr.bf16.gmra.mrb[0].mxu0 %v375
        %v475 = vpop.f32.mrb[0].mxu0
        %v476 = vadd.f32 %v392, %v475
        %v477 = vpop.f32.mrb[0].mxu0
        %v478 = vpop.f32.mrb[0].mxu0
        %v479 = vpop.f32.mrb[0].mxu0
        %480 = vdwg.mxu0
        %v481 = vpack.c.bf16 %v476, %v476
        %v482 = vld [vmem:[%s354] sm:$0xf]
        %v483 = vld [vmem:[%s354 + $0x4] sm:$0xf]
        %v484 = vld [vmem:[%s354 + $0x8] sm:$0xf]
        %v485 = vld [vmem:[%s354 + $0xc] sm:$0xf]
        %v486 = vld [vmem:[%s354 + $0x10] sm:$0xf]
        %v487 = vld [vmem:[%s354 + $0x14] sm:$0xf]
        %v488 = vld [vmem:[%s354 + $0x18] sm:$0xf]
        %v489 = vld [vmem:[%s354 + $0x1c] sm:$0xf]
        %v490 = vld [vmem:[%s354 + $0x20] sm:$0xf]
        %v491 = vld [vmem:[%s354 + $0x24] sm:$0xf]
        %v492 = vld [vmem:[%s354 + $0x28] sm:$0xf]
        %v493 = vld [vmem:[%s354 + $0x2c] sm:$0xf]
        %v494 = vld [vmem:[%s354 + $0x30] sm:$0xf]
        %v495 = vld [vmem:[%s354 + $0x34] sm:$0xf]
        %v496 = vld [vmem:[%s354 + $0x38] sm:$0xf]
        %v497 = vld [vmem:[%s354 + $0x3c] sm:$0xf]
        %v498 = vld [vmem:[#allocation2] sm:$0xff]
        %v515 = vunpack.c.l.b16 %v482
        %v516 = vunpack.c.l.b16 %v483
        %v517 = vunpack.c.l.b16 %v484
        %v518 = vunpack.c.l.b16 %v485
        %v519 = vunpack.c.l.b16 %v486
        %v520 = vunpack.c.l.b16 %v487
        %v521 = vunpack.c.l.b16 %v488
        %v522 = vunpack.c.l.b16 %v489
        %v523 = vunpack.c.l.b16 %v490
        %v524 = vunpack.c.l.b16 %v491
        %v525 = vunpack.c.l.b16 %v492
        %v526 = vunpack.c.l.b16 %v493
        %v527 = vunpack.c.l.b16 %v494
        %v528 = vunpack.c.l.b16 %v495
        %v529 = vunpack.c.l.b16 %v496
        %v530 = vunpack.c.l.b16 %v497
        %v531 = vpack.c.b16 %v516, %v515
        %v532 = vpack.c.b16 %v518, %v517
        %v533 = vpack.c.b16 %v520, %v519
        %v534 = vpack.c.b16 %v522, %v521
        %v535 = vpack.c.b16 %v524, %v523
        %v536 = vpack.c.b16 %v526, %v525
        %v537 = vpack.c.b16 %v528, %v527
        %v538 = vpack.c.b16 %v530, %v529
        %547 = vmatprep.subr.bf16.mxu0 0
        %548 = vmatpush1.bf16.msra.mxu0 %v531
        %549 = vmatprep.subr.bf16.mxu0 0
        %550 = vmatpush1.bf16.msra.mxu0 %v532
        %551 = vmatprep.subr.bf16.mxu0 0
        %552 = vmatpush1.bf16.msra.mxu0 %v533
        %553 = vmatprep.subr.bf16.mxu0 0
        %554 = vmatpush1.bf16.msra.mxu0 %v534
        %555 = vmatprep.subr.bf16.mxu0 0
        %556 = vmatpush1.bf16.msra.mxu0 %v535
        %557 = vmatprep.subr.bf16.mxu0 0
        %558 = vmatpush1.bf16.msra.mxu0 %v536
        %559 = vmatprep.subr.bf16.mxu0 0
        %560 = vmatpush1.bf16.msra.mxu0 %v537
        %561 = vmatprep.subr.bf16.mxu0 0
        %562 = vmatpush1.bf16.msra.mxu0 %v538
        %563 = vmatprep.subr.bf16.mxu0 0
        %564 = vmatpush1.bf16.msra.mxu0 0
        %565 = vmatprep.subr.bf16.mxu0 0
        %566 = vmatpush1.bf16.msra.mxu0 0
        %567 = vmatprep.subr.bf16.mxu0 0
        %568 = vmatpush1.bf16.msra.mxu0 0
        %569 = vmatprep.subr.bf16.mxu0 0
        %570 = vmatpush1.bf16.msra.mxu0 0
        %571 = vmatprep.subr.bf16.mxu0 0
        %572 = vmatpush1.bf16.msra.mxu0 0
        %573 = vmatprep.subr.bf16.mxu0 0
        %574 = vmatpush1.bf16.msra.mxu0 0
        %575 = vmatprep.subr.bf16.mxu0 0
        %576 = vmatpush1.bf16.msra.mxu0 0
        %577 = vmatprep.subr.bf16.mxu0 0
        %578 = vmatpush1.bf16.msra.mxu0 0
        %579 = vmatprep.mubr.bf16.mxu0 0
        %580 = vmatmul.mubr.bf16.gmra.mrb[0].mxu0 %v481
        %v581 = vpop.f32.mrb[0].mxu0
        %v582 = vadd.f32 %v498, %v581
        %v583 = vpop.f32.mrb[0].mxu0
        %v584 = vpop.f32.mrb[0].mxu0
        %v585 = vpop.f32.mrb[0].mxu0
        %586 = vdwg.mxu0
        %587 = vst [vmem:[#allocation2] sm:$0xff] %v582
        %v588 = vadd.f32 %v582, 1.0
        %v589 = vpack.c.bf16 %v588, %v588
        %v590 = vld [vmem:[%s302] sm:$0xff]
        %v591 = vld [vmem:[%s302 + $0x8] sm:$0xff]
        %v592 = vld [vmem:[%s302 + $0x10] sm:$0xff]
        %v593 = vld [vmem:[%s302 + $0x18] sm:$0xff]
        %v594 = vld [vmem:[%s302 + $0x20] sm:$0xff]
        %v595 = vld [vmem:[%s302 + $0x28] sm:$0xff]
        %v596 = vld [vmem:[%s302 + $0x30] sm:$0xff]
        %v597 = vld [vmem:[%s302 + $0x38] sm:$0xff]
        %v598 = vld [vmem:[%s302 + $0x40] sm:$0xff]
        %v599 = vld [vmem:[%s302 + $0x48] sm:$0xff]
        %v600 = vld [vmem:[%s302 + $0x50] sm:$0xff]
        %v601 = vld [vmem:[%s302 + $0x58] sm:$0xff]
        %v602 = vld [vmem:[%s302 + $0x60] sm:$0xff]
        %v603 = vld [vmem:[%s302 + $0x68] sm:$0xff]
        %v604 = vld [vmem:[%s302 + $0x70] sm:$0xff]
        %v605 = vld [vmem:[%s302 + $0x78] sm:$0xff]
        %v606 = vld [vmem:[%s302 + $0x80] sm:$0xff]
        %v607 = vld [vmem:[%s302 + $0x88] sm:$0xff]
        %v608 = vld [vmem:[%s302 + $0x90] sm:$0xff]
        %v609 = vld [vmem:[%s302 + $0x98] sm:$0xff]
        %v610 = vld [vmem:[%s302 + $0xa0] sm:$0xff]
        %v611 = vld [vmem:[%s302 + $0xa8] sm:$0xff]
        %v612 = vld [vmem:[%s302 + $0xb0] sm:$0xff]
        %v613 = vld [vmem:[%s302 + $0xb8] sm:$0xff]
        %v614 = vld [vmem:[%s302 + $0xc0] sm:$0xff]
        %v615 = vld [vmem:[%s302 + $0xc8] sm:$0xff]
        %v616 = vld [vmem:[%s302 + $0xd0] sm:$0xff]
        %v617 = vld [vmem:[%s302 + $0xd8] sm:$0xff]
        %v618 = vld [vmem:[%s302 + $0xe0] sm:$0xff]
        %v619 = vld [vmem:[%s302 + $0xe8] sm:$0xff]
        %v620 = vld [vmem:[%s302 + $0xf0] sm:$0xff]
        %v621 = vld [vmem:[%s302 + $0xf8] sm:$0xff]
        %v654 = vunpack.c.l.b16 %v590
        %v655 = vunpack.c.h.b16 %v590
        %v656 = vunpack.c.l.b16 %v591
        %v657 = vunpack.c.h.b16 %v591
        %v658 = vunpack.c.l.b16 %v592
        %v659 = vunpack.c.h.b16 %v592
        %v660 = vunpack.c.l.b16 %v593
        %v661 = vunpack.c.h.b16 %v593
        %v662 = vunpack.c.l.b16 %v594
        %v663 = vunpack.c.h.b16 %v594
        %v664 = vunpack.c.l.b16 %v595
        %v665 = vunpack.c.h.b16 %v595
        %v666 = vunpack.c.l.b16 %v596
        %v667 = vunpack.c.h.b16 %v596
        %v668 = vunpack.c.l.b16 %v597
        %v669 = vunpack.c.h.b16 %v597
        %v670 = vunpack.c.l.b16 %v598
        %v671 = vunpack.c.h.b16 %v598
        %v672 = vunpack.c.l.b16 %v599
        %v673 = vunpack.c.h.b16 %v599
        %v674 = vunpack.c.l.b16 %v600
        %v675 = vunpack.c.h.b16 %v600
        %v676 = vunpack.c.l.b16 %v601
        %v677 = vunpack.c.h.b16 %v601
        %v678 = vunpack.c.l.b16 %v602
        %v679 = vunpack.c.h.b16 %v602
        %v680 = vunpack.c.l.b16 %v603
        %v681 = vunpack.c.h.b16 %v603
        %v682 = vunpack.c.l.b16 %v604
        %v683 = vunpack.c.h.b16 %v604
        %v684 = vunpack.c.l.b16 %v605
        %v685 = vunpack.c.h.b16 %v605
        %v686 = vunpack.c.l.b16 %v606
        %v687 = vunpack.c.h.b16 %v606
        %v688 = vunpack.c.l.b16 %v607
        %v689 = vunpack.c.h.b16 %v607
        %v690 = vunpack.c.l.b16 %v608
        %v691 = vunpack.c.h.b16 %v608
        %v692 = vunpack.c.l.b16 %v609
        %v693 = vunpack.c.h.b16 %v609
        %v694 = vunpack.c.l.b16 %v610
        %v695 = vunpack.c.h.b16 %v610
        %v696 = vunpack.c.l.b16 %v611
        %v697 = vunpack.c.h.b16 %v611
        %v698 = vunpack.c.l.b16 %v612
        %v699 = vunpack.c.h.b16 %v612
        %v700 = vunpack.c.l.b16 %v613
        %v701 = vunpack.c.h.b16 %v613
        %v702 = vunpack.c.l.b16 %v614
        %v703 = vunpack.c.h.b16 %v614
        %v704 = vunpack.c.l.b16 %v615
        %v705 = vunpack.c.h.b16 %v615
        %v706 = vunpack.c.l.b16 %v616
        %v707 = vunpack.c.h.b16 %v616
        %v708 = vunpack.c.l.b16 %v617
        %v709 = vunpack.c.h.b16 %v617
        %v710 = vunpack.c.l.b16 %v618
        %v711 = vunpack.c.h.b16 %v618
        %v712 = vunpack.c.l.b16 %v619
        %v713 = vunpack.c.h.b16 %v619
        %v714 = vunpack.c.l.b16 %v620
        %v715 = vunpack.c.h.b16 %v620
        %v716 = vunpack.c.l.b16 %v621
        %v717 = vunpack.c.h.b16 %v621
        %v718 = vpack.c.b16 %v658, %v654
        %v719 = vpack.c.b16 %v659, %v655
        %v720 = vpack.c.b16 %v660, %v656
        %v721 = vpack.c.b16 %v661, %v657
        %v722 = vpack.c.b16 %v666, %v662
        %v723 = vpack.c.b16 %v667, %v663
        %v724 = vpack.c.b16 %v668, %v664
        %v725 = vpack.c.b16 %v669, %v665
        %v726 = vpack.c.b16 %v674, %v670
        %v727 = vpack.c.b16 %v675, %v671
        %v728 = vpack.c.b16 %v676, %v672
        %v729 = vpack.c.b16 %v677, %v673
        %v730 = vpack.c.b16 %v682, %v678
        %v731 = vpack.c.b16 %v683, %v679
        %v732 = vpack.c.b16 %v684, %v680
        %v733 = vpack.c.b16 %v685, %v681
        %v734 = vpack.c.b16 %v690, %v686
        %v735 = vpack.c.b16 %v691, %v687
        %v736 = vpack.c.b16 %v692, %v688
        %v737 = vpack.c.b16 %v693, %v689
        %v738 = vpack.c.b16 %v698, %v694
        %v739 = vpack.c.b16 %v699, %v695
        %v740 = vpack.c.b16 %v700, %v696
        %v741 = vpack.c.b16 %v701, %v697
        %v742 = vpack.c.b16 %v706, %v702
        %v743 = vpack.c.b16 %v707, %v703
        %v744 = vpack.c.b16 %v708, %v704
        %v745 = vpack.c.b16 %v709, %v705
        %v746 = vpack.c.b16 %v714, %v710
        %v747 = vpack.c.b16 %v715, %v711
        %v748 = vpack.c.b16 %v716, %v712
        %v749 = vpack.c.b16 %v717, %v713
        %782 = vmatprep.subr.bf16.mxu0 %v719
        %783 = vmatpush1.bf16.msra.mxu0 %v718
        %784 = vmatprep.subr.bf16.mxu0 %v723
        %785 = vmatpush1.bf16.msra.mxu0 %v722
        %786 = vmatprep.subr.bf16.mxu0 %v727
        %787 = vmatpush1.bf16.msra.mxu0 %v726
        %788 = vmatprep.subr.bf16.mxu0 %v731
        %789 = vmatpush1.bf16.msra.mxu0 %v730
        %790 = vmatprep.subr.bf16.mxu0 %v735
        %791 = vmatpush1.bf16.msra.mxu0 %v734
        %792 = vmatprep.subr.bf16.mxu0 %v739
        %793 = vmatpush1.bf16.msra.mxu0 %v738
        %794 = vmatprep.subr.bf16.mxu0 %v743
        %795 = vmatpush1.bf16.msra.mxu0 %v742
        %796 = vmatprep.subr.bf16.mxu0 %v747
        %797 = vmatpush1.bf16.msra.mxu0 %v746
        %798 = vmatprep.subr.bf16.mxu0 0
        %799 = vmatpush1.bf16.msra.mxu0 0
        %800 = vmatprep.subr.bf16.mxu0 0
        %801 = vmatpush1.bf16.msra.mxu0 0
        %802 = vmatprep.subr.bf16.mxu0 0
        %803 = vmatpush1.bf16.msra.mxu0 0
        %804 = vmatprep.subr.bf16.mxu0 0
        %805 = vmatpush1.bf16.msra.mxu0 0
        %806 = vmatprep.subr.bf16.mxu0 0
        %807 = vmatpush1.bf16.msra.mxu0 0
        %808 = vmatprep.subr.bf16.mxu0 0
        %809 = vmatpush1.bf16.msra.mxu0 0
        %810 = vmatprep.subr.bf16.mxu0 0
        %811 = vmatpush1.bf16.msra.mxu0 0
        %812 = vmatprep.subr.bf16.mxu0 0
        %813 = vmatpush1.bf16.msra.mxu0 0
        %814 = vmatprep.mubr.bf16.mxu0 0
        %815 = vmatmul.mubr.bf16.gmra.mrb[0].mxu0 %v589
        %v816 = vpop.f32.mrb[0].mxu0
        %v817 = vadd.f32 0.0, %v816
        %v818 = vpop.f32.mrb[0].mxu0
        %v819 = vadd.f32 0.0, %v818
        %v820 = vpop.f32.mrb[0].mxu0
        %v821 = vpop.f32.mrb[0].mxu0
        %822 = vdwg.mxu0
        %823 = vmatprep.subr.bf16.mxu0 %v721
        %824 = vmatpush1.bf16.msra.mxu0 %v720
        %825 = vmatprep.subr.bf16.mxu0 %v725
        %826 = vmatpush1.bf16.msra.mxu0 %v724
        %827 = vmatprep.subr.bf16.mxu0 %v729
        %828 = vmatpush1.bf16.msra.mxu0 %v728
        %829 = vmatprep.subr.bf16.mxu0 %v733
        %830 = vmatpush1.bf16.msra.mxu0 %v732
        %831 = vmatprep.subr.bf16.mxu0 %v737
        %832 = vmatpush1.bf16.msra.mxu0 %v736
        %833 = vmatprep.subr.bf16.mxu0 %v741
        %834 = vmatpush1.bf16.msra.mxu0 %v740
        %835 = vmatprep.subr.bf16.mxu0 %v745
        %836 = vmatpush1.bf16.msra.mxu0 %v744
        %837 = vmatprep.subr.bf16.mxu0 %v749
        %838 = vmatpush1.bf16.msra.mxu0 %v748
        %839 = vmatprep.subr.bf16.mxu0 0
        %840 = vmatpush1.bf16.msra.mxu0 0
        %841 = vmatprep.subr.bf16.mxu0 0
        %842 = vmatpush1.bf16.msra.mxu0 0
        %843 = vmatprep.subr.bf16.mxu0 0
        %844 = vmatpush1.bf16.msra.mxu0 0
        %845 = vmatprep.subr.bf16.mxu0 0
        %846 = vmatpush1.bf16.msra.mxu0 0
        %847 = vmatprep.subr.bf16.mxu0 0
        %848 = vmatpush1.bf16.msra.mxu0 0
        %849 = vmatprep.subr.bf16.mxu0 0
        %850 = vmatpush1.bf16.msra.mxu0 0
        %851 = vmatprep.subr.bf16.mxu0 0
        %852 = vmatpush1.bf16.msra.mxu0 0
        %853 = vmatprep.subr.bf16.mxu0 0
        %854 = vmatpush1.bf16.msra.mxu0 0
        %855 = vmatprep.mubr.bf16.mxu0 0
        %856 = vmatmul.mubr.bf16.gmra.mrb[0].mxu0 %v589
        %v857 = vpop.f32.mrb[0].mxu0
        %v858 = vadd.f32 0.0, %v857
        %v859 = vpop.f32.mrb[0].mxu0
        %v860 = vadd.f32 0.0, %v859
        %v861 = vpop.f32.mrb[0].mxu0
        %v862 = vpop.f32.mrb[0].mxu0
        %863 = vdwg.mxu0
        %v864 = vmax.f32 %v858, 0.0
        %v865 = vmax.f32 %v860, 0.0
        %v866 = vmul.f32 %v817, %v864
        %v867 = vmul.f32 %v819, %v865
        %v868 = vpack.c.bf16 %v866, %v866
        %v869 = vpack.c.bf16 %v867, %v867
        %v870 = vld [vmem:[%s311] sm:$0xf]
        %v871 = vld [vmem:[%s311 + $0x4] sm:$0xf]
        %v872 = vld [vmem:[%s311 + $0x8] sm:$0xf]
        %v873 = vld [vmem:[%s311 + $0xc] sm:$0xf]
        %v874 = vld [vmem:[%s311 + $0x10] sm:$0xf]
        %v875 = vld [vmem:[%s311 + $0x14] sm:$0xf]
        %v876 = vld [vmem:[%s311 + $0x18] sm:$0xf]
        %v877 = vld [vmem:[%s311 + $0x1c] sm:$0xf]
        %v878 = vld [vmem:[%s311 + $0x20] sm:$0xf]
        %v879 = vld [vmem:[%s311 + $0x24] sm:$0xf]
        %v880 = vld [vmem:[%s311 + $0x28] sm:$0xf]
        %v881 = vld [vmem:[%s311 + $0x2c] sm:$0xf]
        %v882 = vld [vmem:[%s311 + $0x30] sm:$0xf]
        %v883 = vld [vmem:[%s311 + $0x34] sm:$0xf]
        %v884 = vld [vmem:[%s311 + $0x38] sm:$0xf]
        %v885 = vld [vmem:[%s311 + $0x3c] sm:$0xf]
        %v886 = vld [vmem:[%s311 + $0x40] sm:$0xf]
        %v887 = vld [vmem:[%s311 + $0x44] sm:$0xf]
        %v888 = vld [vmem:[%s311 + $0x48] sm:$0xf]
        %v889 = vld [vmem:[%s311 + $0x4c] sm:$0xf]
        %v890 = vld [vmem:[%s311 + $0x50] sm:$0xf]
        %v891 = vld [vmem:[%s311 + $0x54] sm:$0xf]
        %v892 = vld [vmem:[%s311 + $0x58] sm:$0xf]
        %v893 = vld [vmem:[%s311 + $0x5c] sm:$0xf]
        %v894 = vld [vmem:[%s311 + $0x60] sm:$0xf]
        %v895 = vld [vmem:[%s311 + $0x64] sm:$0xf]
        %v896 = vld [vmem:[%s311 + $0x68] sm:$0xf]
        %v897 = vld [vmem:[%s311 + $0x6c] sm:$0xf]
        %v898 = vld [vmem:[%s311 + $0x70] sm:$0xf]
        %v899 = vld [vmem:[%s311 + $0x74] sm:$0xf]
        %v900 = vld [vmem:[%s311 + $0x78] sm:$0xf]
        %v901 = vld [vmem:[%s311 + $0x7c] sm:$0xf]
        %v934 = vunpack.c.l.b16 %v870
        %v935 = vunpack.c.l.b16 %v871
        %v936 = vunpack.c.l.b16 %v872
        %v937 = vunpack.c.l.b16 %v873
        %v938 = vunpack.c.l.b16 %v874
        %v939 = vunpack.c.l.b16 %v875
        %v940 = vunpack.c.l.b16 %v876
        %v941 = vunpack.c.l.b16 %v877
        %v942 = vunpack.c.l.b16 %v878
        %v943 = vunpack.c.l.b16 %v879
        %v944 = vunpack.c.l.b16 %v880
        %v945 = vunpack.c.l.b16 %v881
        %v946 = vunpack.c.l.b16 %v882
        %v947 = vunpack.c.l.b16 %v883
        %v948 = vunpack.c.l.b16 %v884
        %v949 = vunpack.c.l.b16 %v885
        %v950 = vunpack.c.l.b16 %v886
        %v951 = vunpack.c.l.b16 %v887
        %v952 = vunpack.c.l.b16 %v888
        %v953 = vunpack.c.l.b16 %v889
        %v954 = vunpack.c.l.b16 %v890
        %v955 = vunpack.c.l.b16 %v891
        %v956 = vunpack.c.l.b16 %v892
        %v957 = vunpack.c.l.b16 %v893
        %v958 = vunpack.c.l.b16 %v894
        %v959 = vunpack.c.l.b16 %v895
        %v960 = vunpack.c.l.b16 %v896
        %v961 = vunpack.c.l.b16 %v897
        %v962 = vunpack.c.l.b16 %v898
        %v963 = vunpack.c.l.b16 %v899
        %v964 = vunpack.c.l.b16 %v900
        %v965 = vunpack.c.l.b16 %v901
        %v966 = vpack.c.b16 %v935, %v934
        %v967 = vpack.c.b16 %v937, %v936
        %v968 = vpack.c.b16 %v939, %v938
        %v969 = vpack.c.b16 %v941, %v940
        %v970 = vpack.c.b16 %v943, %v942
        %v971 = vpack.c.b16 %v945, %v944
        %v972 = vpack.c.b16 %v947, %v946
        %v973 = vpack.c.b16 %v949, %v948
        %v974 = vpack.c.b16 %v951, %v950
        %v975 = vpack.c.b16 %v953, %v952
        %v976 = vpack.c.b16 %v955, %v954
        %v977 = vpack.c.b16 %v957, %v956
        %v978 = vpack.c.b16 %v959, %v958
        %v979 = vpack.c.b16 %v961, %v960
        %v980 = vpack.c.b16 %v963, %v962
        %v981 = vpack.c.b16 %v965, %v964
        %998 = vmatprep.subr.bf16.mxu0 0
        %999 = vmatpush1.bf16.msra.mxu0 %v966
        %1000 = vmatprep.subr.bf16.mxu0 0
        %1001 = vmatpush1.bf16.msra.mxu0 %v967
        %1002 = vmatprep.subr.bf16.mxu0 0
        %1003 = vmatpush1.bf16.msra.mxu0 %v968
        %1004 = vmatprep.subr.bf16.mxu0 0
        %1005 = vmatpush1.bf16.msra.mxu0 %v969
        %1006 = vmatprep.subr.bf16.mxu0 0
        %1007 = vmatpush1.bf16.msra.mxu0 %v970
        %1008 = vmatprep.subr.bf16.mxu0 0
        %1009 = vmatpush1.bf16.msra.mxu0 %v971
        %1010 = vmatprep.subr.bf16.mxu0 0
        %1011 = vmatpush1.bf16.msra.mxu0 %v972
        %1012 = vmatprep.subr.bf16.mxu0 0
        %1013 = vmatpush1.bf16.msra.mxu0 %v973
        %1014 = vmatprep.subr.bf16.mxu0 0
        %1015 = vmatpush1.bf16.msra.mxu0 %v974
        %1016 = vmatprep.subr.bf16.mxu0 0
        %1017 = vmatpush1.bf16.msra.mxu0 %v975
        %1018 = vmatprep.subr.bf16.mxu0 0
        %1019 = vmatpush1.bf16.msra.mxu0 %v976
        %1020 = vmatprep.subr.bf16.mxu0 0
        %1021 = vmatpush1.bf16.msra.mxu0 %v977
        %1022 = vmatprep.subr.bf16.mxu0 0
        %1023 = vmatpush1.bf16.msra.mxu0 %v978
        %1024 = vmatprep.subr.bf16.mxu0 0
        %1025 = vmatpush1.bf16.msra.mxu0 %v979
        %1026 = vmatprep.subr.bf16.mxu0 0
        %1027 = vmatpush1.bf16.msra.mxu0 %v980
        %1028 = vmatprep.subr.bf16.mxu0 0
        %1029 = vmatpush1.bf16.msra.mxu0 %v981
        %1030 = vmatprep.mubr.bf16.mxu0 %v869
        %1031 = vmatmul.mubr.bf16.gmra.mrb[0].mxu0 %v868
        %v1032 = vpop.f32.mrb[0].mxu0
        %v1033 = vadd.f32 0.0, %v1032
        %v1034 = vpop.f32.mrb[0].mxu0
        %v1035 = vpop.f32.mrb[0].mxu0
        %v1036 = vpop.f32.mrb[0].mxu0
        %1037 = vdwg.mxu0
        %1038 = vst [vmem:[#allocation9] sm:$0xff] %v1033
        // Predicated region
        $region65: #{llama_model.1} parent=43 // pred_check
          %p1039 = pneg %p183
        $region66: #{llama_model.1} parent=43 // pred_check_branch
          %1041 = sbr.rel (%p1039) target = $region68
        $region67: #{llama_model.1} parent=43 // pred_region
          %s1043 = ssub.s32 128, 128
          %1044 = vsyncadd [#allocation5], %s1043
          %s1046 = sshll.u32 [#allocation9], 4
          %s1047 = int_to_ptr.vmem [resolvable:$true] %s1046
          %1049 = dma.vmem_to_hbm [thread:$0]  %s1047, 128, %s6, [#allocation5]
        $region68: #{llama_model.1} parent=43 // pred_fallthru
          _
        // Predicated region
        $region69: #{llama_model.1} parent=43 // pred_check
          %p1050 = pneg %p183
        $region70: #{llama_model.1} parent=43 // pred_check_branch
          %1052 = sbr.rel (%p1050) target = $region72
        $region71: #{llama_model.1} parent=43 // pred_region
          %1053 = dma.done [#allocation5], 128
        $region72: #{llama_model.1} parent=43 // pred_fallthru
          _
      $region44: #{llama_model.1} parent=5 // pred_fallthru
        _
      %p1054 = scmp.le.s32.totalorder 2, %s19
      // Predicated region
      $region73: #{llama_model.1} parent=5 // pred_check
        %p1055 = pneg %p1054
      $region74: #{llama_model.1} parent=5 // pred_check_branch
        %1057 = sbr.rel (%p1055) target = $region76
      $region75: #{llama_model.1} parent=5 // pred_region
        %s1058 = ssub.s32 %s19, 2
      $region76: #{llama_model.1} parent=5 // pred_fallthru
        _
    $region6: #{llama_model.1} parent=1 // loop_footer
      %s23 = sadd.s32 1, %s19
    $region7: #{llama_model.1} parent=1 // loop_footer_branch
      %18 = sbr.rel target = $region3
    $region8: #{llama_model.1} parent=1 // loop_exit
      _
    %1059 = vsyncpa [#allocation4], 1
    %s1060 = scalar_lea.sflag [#allocation4], 1
    %1061 = vsyncpa %s1060, 1
    %1062 = vsyncpa [#allocation7], 1
    %s1063 = scalar_lea.sflag [#allocation7], 1
    %1064 = vsyncpa %s1063, 1
    %1065 = vsyncpa [#allocation5], 1
    %s1066 = scalar_lea.sflag [#allocation5], 1
    %1067 = vsyncpa %s1066, 1

</llo_original>
